<compile_context>
chip_gen: v7x
topology: tpu7x:2x2x1
jax: 0.10.0
libtpu: 0.0.40
codegen_flags: <defaults>
</compile_context>

<pallas_src>
import jax
import jax.numpy as jnp
from jax.experimental import pallas as pl
from jax.experimental.pallas import tpu as pltpu


UNIT_SIZES = lambda in_size, out_size: [in_size, 32, 256, 128, 32, out_size]

_LANE = 128
_SUBLANE = 8


def _round_up(x, m):
    return (x + m - 1) // m * m


def _tanhshrink(x):
    # nn.Tanhshrink: x - tanh(x)
    return x - jnp.tanh(x)


def dqn_kernel(x_ref,
               w0_ref, b0_ref,
               w1_ref, b1_ref,
               w2_ref, b2_ref,
               w3_ref, b3_ref,
               w4_ref, b4_ref,
               o_ref):
    """One (TILE_B, ·) batch tile of the 5-layer MLP. Weights are VMEM-resident."""
    x = x_ref[...]                                  # (TILE_B, in_size) f32
    tile_b = x.shape[0]
    in_size, n0 = w0_ref.shape
    out_size = o_ref.shape[1]                       # un-padded output width

    # ---- Layer 0: K = in_size is tiny -> VPU broadcasted FMAs, all f32. ----
    w0 = w0_ref[...]                                # (in_size, n0) f32
    y = jnp.broadcast_to(b0_ref[...], (tile_b, n0)).astype(jnp.float32)
    for k in range(in_size):                        # static, tiny trip count
        y = y + x[:, k:k + 1] * w0[k:k + 1, :]
    h = _tanhshrink(y)

    # ---- Layers 1..4: bf16 MXU matmul, f32 accumulate / bias / tanhshrink ----
    def layer(h, w_ref, b_ref):
        y = jnp.dot(h.astype(jnp.bfloat16), w_ref[...],
                    preferred_element_type=jnp.float32) + b_ref[...]
        return _tanhshrink(y)

    h = layer(h, w1_ref, b1_ref)
    h = layer(h, w2_ref, b2_ref)
    h = layer(h, w3_ref, b3_ref)
    h = layer(h, w4_ref, b4_ref)                    # (TILE_B, out_pad), lanes >= out_size are 0
    # Store only the real outputs: masked vst's here are negligible and HBM
    # writeback stays out_size-wide instead of 128-wide.
    o_ref[...] = h[:, :out_size].astype(o_ref.dtype)


def init_params(key, in_size, out_size, dtype=jnp.float32):
    """PyTorch-style uniform init; weights stored (in_features, out_features)."""
    sizes = UNIT_SIZES(in_size, out_size)
    params = []
    for i in range(len(sizes) - 1):
        fan_in, fan_out = sizes[i], sizes[i + 1]
        key, kw, kb = jax.random.split(key, 3)
        bound = 1.0 / jnp.sqrt(jnp.float32(fan_in))
        w = jax.random.uniform(kw, (fan_in, fan_out), dtype, -bound, bound)
        b = jax.random.uniform(kb, (1, fan_out), dtype, -bound, bound)
        params.append((w, b))
    return params


def dqn_forward(x, params, *, tile_b=1024):
    """x: (batch, in_size) float32 -> (batch, out_size) float32."""
    batch, in_size = x.shape
    out_size = params[-1][0].shape[1]
    out_pad = _round_up(out_size, _LANE)

    # Batch tiling: tile must be a multiple of 8 sublanes; pad batch to a
    # multiple of the tile so the grid divides evenly.
    tile_b = min(tile_b, _round_up(batch, _SUBLANE))
    padded_batch = _round_up(batch, tile_b)
    if padded_batch != batch:
        x = jnp.pad(x, ((0, padded_batch - batch), (0, 0)))
    grid = (padded_batch // tile_b,)

    (w0, b0), (w1, b1), (w2, b2), (w3, b3), (w4, b4) = params

    # Layer 0 stays f32 (VPU path); hidden/output weights go to bf16 for the
    # MXU. Last layer is zero-padded to 128 output lanes (tanhshrink(0) == 0).
    w1b, w2b, w3b = (w.astype(jnp.bfloat16) for w in (w1, w2, w3))
    w4p = jnp.zeros((w4.shape[0], out_pad), jnp.bfloat16)
    w4p = w4p.at[:, :out_size].set(w4.astype(jnp.bfloat16))
    b4p = jnp.zeros((1, out_pad), jnp.float32)
    b4p = b4p.at[:, :out_size].set(b4.astype(jnp.float32))

    flat_args = [x.astype(jnp.float32),
                 w0.astype(jnp.float32), b0.astype(jnp.float32),
                 w1b, b1.astype(jnp.float32),
                 w2b, b2.astype(jnp.float32),
                 w3b, b3.astype(jnp.float32),
                 w4p, b4p]

    def batch_spec(feat):
        return pl.BlockSpec((tile_b, feat), lambda i: (i, 0))

    def resident_spec(a):
        # Constant block index -> DMA'd once, stays resident across the grid.
        return pl.BlockSpec(a.shape, lambda i: (0, 0))

    in_specs = [batch_spec(in_size)] + [resident_spec(a) for a in flat_args[1:]]
    out_spec = batch_spec(out_size)

    # Advisory cost estimate so XLA doesn't treat the call as free.
    sizes = UNIT_SIZES(in_size, out_size)[:-1] + [out_pad]
    macs = sum(a * b for a, b in zip(sizes[:-1], sizes[1:]))
    acts = sum(sizes[1:])
    weight_bytes = sum(int(a.size) * a.dtype.itemsize for a in flat_args[1:])
    cost = pl.CostEstimate(
        flops=2 * padded_batch * macs,
        transcendentals=padded_batch * acts,
        bytes_accessed=padded_batch * (in_size + out_size) * 4 + weight_bytes,
    )

    out = pl.pallas_call(
        dqn_kernel,
        out_shape=jax.ShapeDtypeStruct((padded_batch, out_size), jnp.float32),
        grid=grid,
        in_specs=in_specs,
        out_specs=out_spec,
        compiler_params=pltpu.CompilerParams(
            dimension_semantics=("parallel",)),
        cost_estimate=cost,
    )(*flat_args)

    if padded_batch != batch:
        out = out[:batch]
    return out


def dqn_forward_ref(x, params):
    """Pure-JAX f32 reference (PyTorch semantics)."""
    h = x
    for w, b in params:
        h = h @ w + b
        h = h - jnp.tanh(h)
    return h


if __name__ == "__main__":
    in_size, out_size, batch = 2, 4, 8   # e.g. EazyMaze: (x, y) coords -> 4 actions

    key = jax.random.PRNGKey(0)
    key, kx = jax.random.split(key)
    x = jax.random.normal(kx, (batch, in_size), jnp.float32)
    params = init_params(key, in_size, out_size)

    out = jax.block_until_ready(dqn_forward(x, params))
    ref = dqn_forward_ref(x, params)

    assert out.shape == (batch, out_size), out.shape
    # bf16 matmul weights -> loosened tolerance vs the f32 reference.
    assert jnp.allclose(out, ref, atol=1e-3, rtol=5e-2), (out, ref)

    print("KERNEL_OK")
</pallas_src>

<mosaic_0001>
module attributes {stable_mosaic.version = 11 : i64} {
  func.func @dqn_kernel(%arg0: i32, %arg1: memref<8x2xf32, #tpu.memory_space<vmem>>, %arg2: memref<2x32xf32, #tpu.memory_space<vmem>>, %arg3: memref<1x32xf32, #tpu.memory_space<vmem>>, %arg4: memref<32x256xbf16, #tpu.memory_space<vmem>>, %arg5: memref<1x256xf32, #tpu.memory_space<vmem>>, %arg6: memref<256x128xbf16, #tpu.memory_space<vmem>>, %arg7: memref<1x128xf32, #tpu.memory_space<vmem>>, %arg8: memref<128x32xbf16, #tpu.memory_space<vmem>>, %arg9: memref<1x32xf32, #tpu.memory_space<vmem>>, %arg10: memref<32x128xbf16, #tpu.memory_space<vmem>>, %arg11: memref<1x128xf32, #tpu.memory_space<vmem>>, %arg12: memref<8x4xf32, #tpu.memory_space<vmem>>) attributes {dimension_semantics = [#tpu.dimension_semantics<parallel>], iteration_bounds = array<i64: 1>, scalar_prefetch = 0 : i64, scratch_operands = 0 : i64, tpu.core_type = #tpu.core_type<tc>, window_params = [{transform_indices = @transform_0, window_bounds = array<i64: 8, 2>}, {pipeline_mode = #tpu.pipeline_mode<synchronous>, transform_indices = @transform_1, window_bounds = array<i64: 2, 32>}, {pipeline_mode = #tpu.pipeline_mode<synchronous>, transform_indices = @transform_2, window_bounds = array<i64: 1, 32>}, {pipeline_mode = #tpu.pipeline_mode<synchronous>, transform_indices = @transform_3, window_bounds = array<i64: 32, 256>}, {pipeline_mode = #tpu.pipeline_mode<synchronous>, transform_indices = @transform_4, window_bounds = array<i64: 1, 256>}, {pipeline_mode = #tpu.pipeline_mode<synchronous>, transform_indices = @transform_5, window_bounds = array<i64: 256, 128>}, {pipeline_mode = #tpu.pipeline_mode<synchronous>, transform_indices = @transform_6, window_bounds = array<i64: 1, 128>}, {pipeline_mode = #tpu.pipeline_mode<synchronous>, transform_indices = @transform_7, window_bounds = array<i64: 128, 32>}, {pipeline_mode = #tpu.pipeline_mode<synchronous>, transform_indices = @transform_8, window_bounds = array<i64: 1, 32>}, {pipeline_mode = #tpu.pipeline_mode<synchronous>, transform_indices = @transform_9, window_bounds = array<i64: 32, 128>}, {pipeline_mode = #tpu.pipeline_mode<synchronous>, transform_indices = @transform_10, window_bounds = array<i64: 1, 128>}, {transform_indices = @transform_11, window_bounds = array<i64: 8, 4>}]} {
    %c0 = arith.constant 0 : index
    %c0_0 = arith.constant 0 : index
    %0 = vector.load %arg1[%c0, %c0_0] : memref<8x2xf32, #tpu.memory_space<vmem>>, vector<8x2xf32>
    %c0_1 = arith.constant 0 : index
    %c0_2 = arith.constant 0 : index
    %1 = vector.load %arg2[%c0_1, %c0_2] : memref<2x32xf32, #tpu.memory_space<vmem>>, vector<2x32xf32>
    %c0_3 = arith.constant 0 : index
    %c0_4 = arith.constant 0 : index
    %2 = vector.load %arg3[%c0_3, %c0_4] : memref<1x32xf32, #tpu.memory_space<vmem>>, vector<1x32xf32>
    %3 = vector.shape_cast %2 : vector<1x32xf32> to vector<1x32xf32>
    %4 = vector.broadcast %3 : vector<1x32xf32> to vector<8x32xf32>
    %5 = vector.extract_strided_slice %0 {offsets = [0, 0], sizes = [8, 1], strides = [1, 1]} : vector<8x2xf32> to vector<8x1xf32>
    %6 = vector.extract_strided_slice %1 {offsets = [0, 0], sizes = [1, 32], strides = [1, 1]} : vector<2x32xf32> to vector<1x32xf32>
    %7 = vector.broadcast %5 : vector<8x1xf32> to vector<8x32xf32>
    %8 = vector.broadcast %6 : vector<1x32xf32> to vector<8x32xf32>
    %9 = arith.mulf %7, %8 : vector<8x32xf32>
    %10 = arith.addf %4, %9 : vector<8x32xf32>
    %11 = vector.extract_strided_slice %0 {offsets = [0, 1], sizes = [8, 1], strides = [1, 1]} : vector<8x2xf32> to vector<8x1xf32>
    %12 = vector.extract_strided_slice %1 {offsets = [1, 0], sizes = [1, 32], strides = [1, 1]} : vector<2x32xf32> to vector<1x32xf32>
    %13 = vector.broadcast %11 : vector<8x1xf32> to vector<8x32xf32>
    %14 = vector.broadcast %12 : vector<1x32xf32> to vector<8x32xf32>
    %15 = arith.mulf %13, %14 : vector<8x32xf32>
    %16 = arith.addf %10, %15 : vector<8x32xf32>
    %17 = math.tanh %16 : vector<8x32xf32>
    %18 = arith.subf %16, %17 : vector<8x32xf32>
    %19 = arith.truncf %18 : vector<8x32xf32> to vector<8x32xbf16>
    %c0_5 = arith.constant 0 : index
    %c0_6 = arith.constant 0 : index
    %20 = vector.load %arg4[%c0_5, %c0_6] : memref<32x256xbf16, #tpu.memory_space<vmem>>, vector<32x256xbf16>
    %cst = arith.constant dense<0.000000e+00> : vector<8x256xf32>
    %21 = tpu.matmul %19, %20, %cst {dimension_numbers = #tpu.dot_dimension_numbers<[1], [0], [0], [1], [0, 0, 1, 1], [], []>} : vector<8x32xbf16>, vector<32x256xbf16>, vector<8x256xf32> -> vector<8x256xf32>
    %c0_7 = arith.constant 0 : index
    %c0_8 = arith.constant 0 : index
    %22 = vector.load %arg5[%c0_7, %c0_8] : memref<1x256xf32, #tpu.memory_space<vmem>>, vector<1x256xf32>
    %23 = vector.broadcast %22 : vector<1x256xf32> to vector<8x256xf32>
    %24 = arith.addf %21, %23 : vector<8x256xf32>
    %25 = math.tanh %24 : vector<8x256xf32>
    %26 = arith.subf %24, %25 : vector<8x256xf32>
    %27 = arith.truncf %26 : vector<8x256xf32> to vector<8x256xbf16>
    %c0_9 = arith.constant 0 : index
    %c0_10 = arith.constant 0 : index
    %28 = vector.load %arg6[%c0_9, %c0_10] : memref<256x128xbf16, #tpu.memory_space<vmem>>, vector<256x128xbf16>
    %cst_11 = arith.constant dense<0.000000e+00> : vector<8x128xf32>
    %29 = tpu.matmul %27, %28, %cst_11 {dimension_numbers = #tpu.dot_dimension_numbers<[1], [0], [0], [1], [0, 0, 1, 1], [], []>} : vector<8x256xbf16>, vector<256x128xbf16>, vector<8x128xf32> -> vector<8x128xf32>
    %c0_12 = arith.constant 0 : index
    %c0_13 = arith.constant 0 : index
    %30 = vector.load %arg7[%c0_12, %c0_13] : memref<1x128xf32, #tpu.memory_space<vmem>>, vector<1x128xf32>
    %31 = vector.broadcast %30 : vector<1x128xf32> to vector<8x128xf32>
    %32 = arith.addf %29, %31 : vector<8x128xf32>
    %33 = math.tanh %32 : vector<8x128xf32>
    %34 = arith.subf %32, %33 : vector<8x128xf32>
    %35 = arith.truncf %34 : vector<8x128xf32> to vector<8x128xbf16>
    %c0_14 = arith.constant 0 : index
    %c0_15 = arith.constant 0 : index
    %36 = vector.load %arg8[%c0_14, %c0_15] : memref<128x32xbf16, #tpu.memory_space<vmem>>, vector<128x32xbf16>
    %cst_16 = arith.constant dense<0.000000e+00> : vector<8x32xf32>
    %37 = tpu.matmul %35, %36, %cst_16 {dimension_numbers = #tpu.dot_dimension_numbers<[1], [0], [0], [1], [0, 0, 1, 1], [], []>} : vector<8x128xbf16>, vector<128x32xbf16>, vector<8x32xf32> -> vector<8x32xf32>
    %c0_17 = arith.constant 0 : index
    %c0_18 = arith.constant 0 : index
    %38 = vector.load %arg9[%c0_17, %c0_18] : memref<1x32xf32, #tpu.memory_space<vmem>>, vector<1x32xf32>
    %39 = vector.broadcast %38 : vector<1x32xf32> to vector<8x32xf32>
    %40 = arith.addf %37, %39 : vector<8x32xf32>
    %41 = math.tanh %40 : vector<8x32xf32>
    %42 = arith.subf %40, %41 : vector<8x32xf32>
    %43 = arith.truncf %42 : vector<8x32xf32> to vector<8x32xbf16>
    %c0_19 = arith.constant 0 : index
    %c0_20 = arith.constant 0 : index
    %44 = vector.load %arg10[%c0_19, %c0_20] : memref<32x128xbf16, #tpu.memory_space<vmem>>, vector<32x128xbf16>
    %cst_21 = arith.constant dense<0.000000e+00> : vector<8x128xf32>
    %45 = tpu.matmul %43, %44, %cst_21 {dimension_numbers = #tpu.dot_dimension_numbers<[1], [0], [0], [1], [0, 0, 1, 1], [], []>} : vector<8x32xbf16>, vector<32x128xbf16>, vector<8x128xf32> -> vector<8x128xf32>
    %c0_22 = arith.constant 0 : index
    %c0_23 = arith.constant 0 : index
    %46 = vector.load %arg11[%c0_22, %c0_23] : memref<1x128xf32, #tpu.memory_space<vmem>>, vector<1x128xf32>
    %47 = vector.broadcast %46 : vector<1x128xf32> to vector<8x128xf32>
    %48 = arith.addf %45, %47 : vector<8x128xf32>
    %49 = math.tanh %48 : vector<8x128xf32>
    %50 = arith.subf %48, %49 : vector<8x128xf32>
    %51 = vector.extract_strided_slice %50 {offsets = [0, 0], sizes = [8, 4], strides = [1, 1]} : vector<8x128xf32> to vector<8x4xf32>
    %c0_24 = arith.constant 0 : index
    %c0_25 = arith.constant 0 : index
    %52 = vector.load %arg12[%c0_24, %c0_25] : memref<8x4xf32, #tpu.memory_space<vmem>>, vector<8x4xf32>
    tpu.vector_store %arg12[%c0_24, %c0_25], %51 {strides = array<i32>} : memref<8x4xf32, #tpu.memory_space<vmem>>, vector<8x4xf32>,
    return
  }
  func.func @transform_0(%arg0: i32) -> (i32, i32) {
    %c0_i32 = arith.constant 0 : i32
    %c0_i32_0 = arith.constant 0 : i32
    return %arg0, %c0_i32 : i32, i32
  }
  func.func @transform_1(%arg0: i32) -> (i32, i32) {
    %c0_i32 = arith.constant 0 : i32
    %c0_i32_0 = arith.constant 0 : i32
    %c0_i32_1 = arith.constant 0 : i32
    return %c0_i32, %c0_i32_0 : i32, i32
  }
  func.func @transform_2(%arg0: i32) -> (i32, i32) {
    %c0_i32 = arith.constant 0 : i32
    %c0_i32_0 = arith.constant 0 : i32
    %c0_i32_1 = arith.constant 0 : i32
    return %c0_i32, %c0_i32_0 : i32, i32
  }
  func.func @transform_3(%arg0: i32) -> (i32, i32) {
    %c0_i32 = arith.constant 0 : i32
    %c0_i32_0 = arith.constant 0 : i32
    %c0_i32_1 = arith.constant 0 : i32
    return %c0_i32, %c0_i32_0 : i32, i32
  }
  func.func @transform_4(%arg0: i32) -> (i32, i32) {
    %c0_i32 = arith.constant 0 : i32
    %c0_i32_0 = arith.constant 0 : i32
    %c0_i32_1 = arith.constant 0 : i32
    return %c0_i32, %c0_i32_0 : i32, i32
  }
  func.func @transform_5(%arg0: i32) -> (i32, i32) {
    %c0_i32 = arith.constant 0 : i32
    %c0_i32_0 = arith.constant 0 : i32
    %c0_i32_1 = arith.constant 0 : i32
    return %c0_i32, %c0_i32_0 : i32, i32
  }
  func.func @transform_6(%arg0: i32) -> (i32, i32) {
    %c0_i32 = arith.constant 0 : i32
    %c0_i32_0 = arith.constant 0 : i32
    %c0_i32_1 = arith.constant 0 : i32
    return %c0_i32, %c0_i32_0 : i32, i32
  }
  func.func @transform_7(%arg0: i32) -> (i32, i32) {
    %c0_i32 = arith.constant 0 : i32
    %c0_i32_0 = arith.constant 0 : i32
    %c0_i32_1 = arith.constant 0 : i32
    return %c0_i32, %c0_i32_0 : i32, i32
  }
  func.func @transform_8(%arg0: i32) -> (i32, i32) {
    %c0_i32 = arith.constant 0 : i32
    %c0_i32_0 = arith.constant 0 : i32
    %c0_i32_1 = arith.constant 0 : i32
    return %c0_i32, %c0_i32_0 : i32, i32
  }
  func.func @transform_9(%arg0: i32) -> (i32, i32) {
    %c0_i32 = arith.constant 0 : i32
    %c0_i32_0 = arith.constant 0 : i32
    %c0_i32_1 = arith.constant 0 : i32
    return %c0_i32, %c0_i32_0 : i32, i32
  }
  func.func @transform_10(%arg0: i32) -> (i32, i32) {
    %c0_i32 = arith.constant 0 : i32
    %c0_i32_0 = arith.constant 0 : i32
    %c0_i32_1 = arith.constant 0 : i32
    return %c0_i32, %c0_i32_0 : i32, i32
  }
  func.func @transform_11(%arg0: i32) -> (i32, i32) {
    %c0_i32 = arith.constant 0 : i32
    %c0_i32_0 = arith.constant 0 : i32
    return %arg0, %c0_i32 : i32, i32
  }
}

</mosaic_0001>

<llo_original>
// kernel: tpu_custom_call.1
$region0: #{tpu_custom_call.1}
  #allocation0 [shape = 'u32[]', space=smem, size = 0x4, offset = 0x4, fixed_abs, tag = 'smem constant byte address 0x4 - core index']
  #allocation1 [shape = 'u32[144,128]{1,0:T(1,128)}', space=vmem, size = 0x12000, scoped, tag = 'internal scratch']
  %s0 = inlined_call_operand.vmem [shape: f32[8,2], index: 0, kind: input, shape index: {}]
  %s1 = inlined_call_operand.vmem [shape: f32[2,32], index: 1, kind: input, shape index: {}]
  %s2 = inlined_call_operand.vmem [shape: f32[1,32], index: 2, kind: input, shape index: {}]
  %s3 = inlined_call_operand.vmem [shape: bf16[32,256], index: 3, kind: input, shape index: {}]
  %s4 = inlined_call_operand.vmem [shape: f32[1,256], index: 4, kind: input, shape index: {}]
  %s5 = inlined_call_operand.hbm [shape: bf16[256,128], index: 5, kind: input, shape index: {}]
  %s6 = inlined_call_operand.vmem [shape: f32[1,128], index: 6, kind: input, shape index: {}]
  %s7 = inlined_call_operand.vmem [shape: bf16[128,32], index: 7, kind: input, shape index: {}]
  %s8 = inlined_call_operand.vmem [shape: f32[1,32], index: 8, kind: input, shape index: {}]
  %s9 = inlined_call_operand.vmem [shape: bf16[32,128], index: 9, kind: input, shape index: {}]
  %s10 = inlined_call_operand.vmem [shape: f32[1,128], index: 10, kind: input, shape index: {}]
  %s11 = inlined_call_operand.vmem [shape: f32[8,4], index: 11, kind: output, shape index: {}]
  %s12 = sld [smem:[#allocation0]]
  $region58: #{tpu_custom_call.1} parent=0
    _
  %s14 = ssub.s32 1, %s12
  %s15 = scalar_select 0, %s14, %s12
  $region1: #{tpu_custom_call.1} parent=0
    #allocation2 [shape = 'u8[65536]{0}', space=vmem, size = 0x10000, scoped, tag = 'input window, operand 5, single buffered']
    #allocation3 [shape = 's32[1]{0}', space=sflag, size = 0x4, scoped, tag = 'scoped memory for tpu_custom_call.1']
    %16 = vsyncpa [#allocation3], 0
    // Predicated region
    $region2: #{tpu_custom_call.1} parent=1 // pred_check
      _
    $region3: #{tpu_custom_call.1} parent=1 // pred_check_branch
      %18 = sbr.rel (0) target = $region5
    $region4: #{tpu_custom_call.1} parent=1 // pred_region
      _
    $region5: #{tpu_custom_call.1} parent=1 // pred_fallthru
      _
    // Predicated region
    $region6: #{tpu_custom_call.1} parent=1 // pred_check
      _
    $region7: #{tpu_custom_call.1} parent=1 // pred_check_branch
      %20 = sbr.rel (0) target = $region9
    $region8: #{tpu_custom_call.1} parent=1 // pred_region
      _
    $region9: #{tpu_custom_call.1} parent=1 // pred_fallthru
      _
    // Predicated region
    $region10: #{tpu_custom_call.1} parent=1 // pred_check
      _
    $region11: #{tpu_custom_call.1} parent=1 // pred_check_branch
      %22 = sbr.rel (0) target = $region13
    $region12: #{tpu_custom_call.1} parent=1 // pred_region
      _
    $region13: #{tpu_custom_call.1} parent=1 // pred_fallthru
      _
    // Predicated region
    $region14: #{tpu_custom_call.1} parent=1 // pred_check
      _
    $region15: #{tpu_custom_call.1} parent=1 // pred_check_branch
      %24 = sbr.rel (0) target = $region17
    $region16: #{tpu_custom_call.1} parent=1 // pred_region
      _
    $region17: #{tpu_custom_call.1} parent=1 // pred_fallthru
      _
    // Predicated region
    $region18: #{tpu_custom_call.1} parent=1 // pred_check
      _
    $region19: #{tpu_custom_call.1} parent=1 // pred_check_branch
      %26 = sbr.rel (0) target = $region21
    $region20: #{tpu_custom_call.1} parent=1 // pred_region
      _
    $region21: #{tpu_custom_call.1} parent=1 // pred_fallthru
      _
    // Predicated region
    $region22: #{tpu_custom_call.1} parent=1 // pred_check
      _
    $region23: #{tpu_custom_call.1} parent=1 // pred_check_branch
      %28 = sbr.rel (0) target = $region25
    $region24: #{tpu_custom_call.1} parent=1 // pred_region
      %s30 = ssub.s32 2048, 2048
      %31 = vsyncadd [#allocation3], %s30
      %s32 = sshll.u32 [#allocation2], 4
      %s33 = int_to_ptr.vmem [resolvable:$true] %s32
      %38 = dma.hbm_to_vmem [thread:$0]  %s5, 2048, %s33, [#allocation3], 64, 64, 4
    $region25: #{tpu_custom_call.1} parent=1 // pred_fallthru
      _
    // Predicated region
    $region26: #{tpu_custom_call.1} parent=1 // pred_check
      _
    $region27: #{tpu_custom_call.1} parent=1 // pred_check_branch
      %40 = sbr.rel (0) target = $region29
    $region28: #{tpu_custom_call.1} parent=1 // pred_region
      _
    $region29: #{tpu_custom_call.1} parent=1 // pred_fallthru
      _
    // Predicated region
    $region30: #{tpu_custom_call.1} parent=1 // pred_check
      _
    $region31: #{tpu_custom_call.1} parent=1 // pred_check_branch
      %42 = sbr.rel (0) target = $region33
    $region32: #{tpu_custom_call.1} parent=1 // pred_region
      _
    $region33: #{tpu_custom_call.1} parent=1 // pred_fallthru
      _
    // Predicated region
    $region34: #{tpu_custom_call.1} parent=1 // pred_check
      _
    $region35: #{tpu_custom_call.1} parent=1 // pred_check_branch
      %44 = sbr.rel (0) target = $region37
    $region36: #{tpu_custom_call.1} parent=1 // pred_region
      _
    $region37: #{tpu_custom_call.1} parent=1 // pred_fallthru
      _
    // Predicated region
    $region38: #{tpu_custom_call.1} parent=1 // pred_check
      _
    $region39: #{tpu_custom_call.1} parent=1 // pred_check_branch
      %46 = sbr.rel (0) target = $region41
    $region40: #{tpu_custom_call.1} parent=1 // pred_region
      _
    $region41: #{tpu_custom_call.1} parent=1 // pred_fallthru
      _
    // Predicated region
    $region42: #{tpu_custom_call.1} parent=1 // pred_check
      _
    $region43: #{tpu_custom_call.1} parent=1 // pred_check_branch
      %48 = sbr.rel (0) target = $region45
    $region44: #{tpu_custom_call.1} parent=1 // pred_region
      _
    $region45: #{tpu_custom_call.1} parent=1 // pred_fallthru
      _
    // Predicated region
    $region46: #{tpu_custom_call.1} parent=1 // pred_check
      _
    $region47: #{tpu_custom_call.1} parent=1 // pred_check_branch
      %50 = sbr.rel (0) target = $region49
    $region48: #{tpu_custom_call.1} parent=1 // pred_region
      %51 = dma.done [#allocation3], 2048
    $region49: #{tpu_custom_call.1} parent=1 // pred_fallthru
      _
    %v53 = vld [vmem:[%s0] sm:$0xff]
    %v54 = vld [vmem:[%s1] sm:$0x3]
    %v55 = vld [vmem:[%s2] sm:$0x1]
    %v57 = vlaneseq
    %v58 = vshrl.u32 %v57, 7
    %v59 = vsub.s32 0, %v58
    %v60 = vrot.slane %v55, %v59
    %63 = vset.pattern.permute.xlu0 0
    %64 = vperm.xlu0 %63, %v53
    %v65 = vpop.permute.xlu0 %64
    %v67 = vlaneseq
    %v68 = vshrl.u32 %v67, 7
    %v69 = vsub.s32 0, %v68
    %v70 = vrot.slane %v54, %v69
    %v71 = vmul.f32 %v65, %v70
    %v72 = vadd.f32 %v60, %v71
    %73 = vset.pattern.permute.xlu0 1
    %74 = vperm.xlu0 %73, %v53
    %v75 = vpop.permute.xlu0 %74
    %v77 = vlaneseq
    %v78 = vshrl.u32 %v77, 7
    %v79 = vsub.s32 1, %v78
    %v80 = vrot.slane %v54, %v79
    %v81 = vmul.f32 %v75, %v80
    %v82 = vadd.f32 %v72, %v81
    %v83 = vtanh.pop %v82
    %v84 = vsub.f32 %v82, %v83
    %v85 = vpack.c.bf16 %v84, %v84
    %v86 = vld [vmem:[%s3] sm:$0xff]
    %v87 = vld [vmem:[%s3 + $0x8] sm:$0xff]
    %v88 = vld [vmem:[%s3 + $0x10] sm:$0xff]
    %v89 = vld [vmem:[%s3 + $0x18] sm:$0xff]
    %v90 = vld [vmem:[%s4] sm:$0x3]
    %v92 = vlaneseq
    %v93 = vshrl.u32 %v92, 7
    %v94 = vsub.s32 0, %v93
    %v95 = vrot.slane %v90, %v94
    %v96 = vlaneseq
    %v97 = vshrl.u32 %v96, 7
    %v98 = vsub.s32 1, %v97
    %v99 = vrot.slane %v90, %v98
    %v106 = vunpack.c.l.b16 %v86
    %v107 = vunpack.c.h.b16 %v86
    %v108 = vunpack.c.l.b16 %v87
    %v109 = vunpack.c.h.b16 %v87
    %v110 = vunpack.c.l.b16 %v88
    %v111 = vunpack.c.h.b16 %v88
    %v112 = vunpack.c.l.b16 %v89
    %v113 = vunpack.c.h.b16 %v89
    %v114 = vpack.c.b16 %v108, %v106
    %v115 = vpack.c.b16 %v109, %v107
    %v116 = vpack.c.b16 %v112, %v110
    %v117 = vpack.c.b16 %v113, %v111
    %vm122 = vcmask 261120
    %v124 = vsel %vm122, %v85, 0
    %126 = vmatprep.subr.bf16.mxu0 %v115
    %127 = vmatpush1.bf16.msra.mxu0 %v114
    %128 = vmatprep.subr.bf16.mxu0 %v117
    %129 = vmatpush1.bf16.msra.mxu0 %v116
    %130 = vmatprep.subr.bf16.mxu0 0
    %131 = vmatpush1.bf16.msra.mxu0 0
    %132 = vmatprep.subr.bf16.mxu0 0
    %133 = vmatpush1.bf16.msra.mxu0 0
    %134 = vmatprep.subr.bf16.mxu0 0
    %135 = vmatpush1.bf16.msra.mxu0 0
    %136 = vmatprep.subr.bf16.mxu0 0
    %137 = vmatpush1.bf16.msra.mxu0 0
    %138 = vmatprep.subr.bf16.mxu0 0
    %139 = vmatpush1.bf16.msra.mxu0 0
    %140 = vmatprep.subr.bf16.mxu0 0
    %141 = vmatpush1.bf16.msra.mxu0 0
    %142 = vmatprep.subr.bf16.mxu0 0
    %143 = vmatpush1.bf16.msra.mxu0 0
    %144 = vmatprep.subr.bf16.mxu0 0
    %145 = vmatpush1.bf16.msra.mxu0 0
    %146 = vmatprep.subr.bf16.mxu0 0
    %147 = vmatpush1.bf16.msra.mxu0 0
    %148 = vmatprep.subr.bf16.mxu0 0
    %149 = vmatpush1.bf16.msra.mxu0 0
    %150 = vmatprep.subr.bf16.mxu0 0
    %151 = vmatpush1.bf16.msra.mxu0 0
    %152 = vmatprep.subr.bf16.mxu0 0
    %153 = vmatpush1.bf16.msra.mxu0 0
    %154 = vmatprep.subr.bf16.mxu0 0
    %155 = vmatpush1.bf16.msra.mxu0 0
    %156 = vmatprep.subr.bf16.mxu0 0
    %157 = vmatpush1.bf16.msra.mxu0 0
    %158 = vmatprep.mubr.bf16.mxu0 0
    %159 = vmatmul.mubr.bf16.gmra.mrb[0].mxu0 %v124
    %v160 = vpop.f32.mrb[0].mxu0
    %v161 = vadd.f32 %v95, %v160
    %v162 = vpop.f32.mrb[0].mxu0
    %v163 = vadd.f32 %v99, %v162
    %v164 = vpop.f32.mrb[0].mxu0
    %v165 = vpop.f32.mrb[0].mxu0
    %166 = vdwg.mxu0
    %v167 = vtanh.pop %v161
    %v168 = vtanh.pop %v163
    %v169 = vsub.f32 %v161, %v167
    %v170 = vsub.f32 %v163, %v168
    %v171 = vpack.c.bf16 %v169, %v169
    %v172 = vpack.c.bf16 %v170, %v170
    %v173 = vld [vmem:[#allocation2] sm:$0xf]
    %v174 = vld [vmem:[#allocation2 + $0x4] sm:$0xf]
    %v175 = vld [vmem:[#allocation2 + $0x8] sm:$0xf]
    %v176 = vld [vmem:[#allocation2 + $0xc] sm:$0xf]
    %v177 = vld [vmem:[#allocation2 + $0x10] sm:$0xf]
    %v178 = vld [vmem:[#allocation2 + $0x14] sm:$0xf]
    %v179 = vld [vmem:[#allocation2 + $0x18] sm:$0xf]
    %v180 = vld [vmem:[#allocation2 + $0x1c] sm:$0xf]
    %v181 = vld [vmem:[#allocation2 + $0x20] sm:$0xf]
    %v182 = vld [vmem:[#allocation2 + $0x24] sm:$0xf]
    %v183 = vld [vmem:[#allocation2 + $0x28] sm:$0xf]
    %v184 = vld [vmem:[#allocation2 + $0x2c] sm:$0xf]
    %v185 = vld [vmem:[#allocation2 + $0x30] sm:$0xf]
    %v186 = vld [vmem:[#allocation2 + $0x34] sm:$0xf]
    %v187 = vld [vmem:[#allocation2 + $0x38] sm:$0xf]
    %v188 = vld [vmem:[#allocation2 + $0x3c] sm:$0xf]
    %v189 = vld [vmem:[#allocation2 + $0x40] sm:$0xf]
    %v190 = vld [vmem:[#allocation2 + $0x44] sm:$0xf]
    %v191 = vld [vmem:[#allocation2 + $0x48] sm:$0xf]
    %v192 = vld [vmem:[#allocation2 + $0x4c] sm:$0xf]
    %v193 = vld [vmem:[#allocation2 + $0x50] sm:$0xf]
    %v194 = vld [vmem:[#allocation2 + $0x54] sm:$0xf]
    %v195 = vld [vmem:[#allocation2 + $0x58] sm:$0xf]
    %v196 = vld [vmem:[#allocation2 + $0x5c] sm:$0xf]
    %v197 = vld [vmem:[#allocation2 + $0x60] sm:$0xf]
    %v198 = vld [vmem:[#allocation2 + $0x64] sm:$0xf]
    %v199 = vld [vmem:[#allocation2 + $0x68] sm:$0xf]
    %v200 = vld [vmem:[#allocation2 + $0x6c] sm:$0xf]
    %v201 = vld [vmem:[#allocation2 + $0x70] sm:$0xf]
    %v202 = vld [vmem:[#allocation2 + $0x74] sm:$0xf]
    %v203 = vld [vmem:[#allocation2 + $0x78] sm:$0xf]
    %v204 = vld [vmem:[#allocation2 + $0x7c] sm:$0xf]
    %v205 = vld [vmem:[%s6] sm:$0x1]
    %v207 = vlaneseq
    %v208 = vshrl.u32 %v207, 7
    %v209 = vsub.s32 0, %v208
    %v210 = vrot.slane %v205, %v209
    %v244 = vunpack.c.l.b16 %v173
    %v245 = vunpack.c.l.b16 %v174
    %v246 = vunpack.c.l.b16 %v175
    %v247 = vunpack.c.l.b16 %v176
    %v248 = vunpack.c.l.b16 %v177
    %v249 = vunpack.c.l.b16 %v178
    %v250 = vunpack.c.l.b16 %v179
    %v251 = vunpack.c.l.b16 %v180
    %v252 = vunpack.c.l.b16 %v181
    %v253 = vunpack.c.l.b16 %v182
    %v254 = vunpack.c.l.b16 %v183
    %v255 = vunpack.c.l.b16 %v184
    %v256 = vunpack.c.l.b16 %v185
    %v257 = vunpack.c.l.b16 %v186
    %v258 = vunpack.c.l.b16 %v187
    %v259 = vunpack.c.l.b16 %v188
    %v260 = vunpack.c.l.b16 %v189
    %v261 = vunpack.c.l.b16 %v190
    %v262 = vunpack.c.l.b16 %v191
    %v263 = vunpack.c.l.b16 %v192
    %v264 = vunpack.c.l.b16 %v193
    %v265 = vunpack.c.l.b16 %v194
    %v266 = vunpack.c.l.b16 %v195
    %v267 = vunpack.c.l.b16 %v196
    %v268 = vunpack.c.l.b16 %v197
    %v269 = vunpack.c.l.b16 %v198
    %v270 = vunpack.c.l.b16 %v199
    %v271 = vunpack.c.l.b16 %v200
    %v272 = vunpack.c.l.b16 %v201
    %v273 = vunpack.c.l.b16 %v202
    %v274 = vunpack.c.l.b16 %v203
    %v275 = vunpack.c.l.b16 %v204
    %v276 = vpack.c.b16 %v245, %v244
    %v277 = vpack.c.b16 %v247, %v246
    %v278 = vpack.c.b16 %v249, %v248
    %v279 = vpack.c.b16 %v251, %v250
    %v280 = vpack.c.b16 %v253, %v252
    %v281 = vpack.c.b16 %v255, %v254
    %v282 = vpack.c.b16 %v257, %v256
    %v283 = vpack.c.b16 %v259, %v258
    %v284 = vpack.c.b16 %v261, %v260
    %v285 = vpack.c.b16 %v263, %v262
    %v286 = vpack.c.b16 %v265, %v264
    %v287 = vpack.c.b16 %v267, %v266
    %v288 = vpack.c.b16 %v269, %v268
    %v289 = vpack.c.b16 %v271, %v270
    %v290 = vpack.c.b16 %v273, %v272
    %v291 = vpack.c.b16 %v275, %v274
    %308 = vmatprep.subr.bf16.mxu0 0
    %309 = vmatpush1.bf16.msra.mxu0 %v276
    %310 = vmatprep.subr.bf16.mxu0 0
    %311 = vmatpush1.bf16.msra.mxu0 %v277
    %312 = vmatprep.subr.bf16.mxu0 0
    %313 = vmatpush1.bf16.msra.mxu0 %v278
    %314 = vmatprep.subr.bf16.mxu0 0
    %315 = vmatpush1.bf16.msra.mxu0 %v279
    %316 = vmatprep.subr.bf16.mxu0 0
    %317 = vmatpush1.bf16.msra.mxu0 %v280
    %318 = vmatprep.subr.bf16.mxu0 0
    %319 = vmatpush1.bf16.msra.mxu0 %v281
    %320 = vmatprep.subr.bf16.mxu0 0
    %321 = vmatpush1.bf16.msra.mxu0 %v282
    %322 = vmatprep.subr.bf16.mxu0 0
    %323 = vmatpush1.bf16.msra.mxu0 %v283
    %324 = vmatprep.subr.bf16.mxu0 0
    %325 = vmatpush1.bf16.msra.mxu0 %v284
    %326 = vmatprep.subr.bf16.mxu0 0
    %327 = vmatpush1.bf16.msra.mxu0 %v285
    %328 = vmatprep.subr.bf16.mxu0 0
    %329 = vmatpush1.bf16.msra.mxu0 %v286
    %330 = vmatprep.subr.bf16.mxu0 0
    %331 = vmatpush1.bf16.msra.mxu0 %v287
    %332 = vmatprep.subr.bf16.mxu0 0
    %333 = vmatpush1.bf16.msra.mxu0 %v288
    %334 = vmatprep.subr.bf16.mxu0 0
    %335 = vmatpush1.bf16.msra.mxu0 %v289
    %336 = vmatprep.subr.bf16.mxu0 0
    %337 = vmatpush1.bf16.msra.mxu0 %v290
    %338 = vmatprep.subr.bf16.mxu0 0
    %339 = vmatpush1.bf16.msra.mxu0 %v291
    %340 = vmatprep.mubr.bf16.mxu0 %v172
    %341 = vmatmul.mubr.bf16.gmra.mrb[0].mxu0 %v171
    %v342 = vpop.f32.mrb[0].mxu0
    %v343 = vadd.f32 %v210, %v342
    %v344 = vpop.f32.mrb[0].mxu0
    %v345 = vpop.f32.mrb[0].mxu0
    %v346 = vpop.f32.mrb[0].mxu0
    %347 = vdwg.mxu0
    %v348 = vtanh.pop %v343
    %v349 = vsub.f32 %v343, %v348
    %v350 = vpack.c.bf16 %v349, %v349
    %v351 = vld [vmem:[%s7] sm:$0xf]
    %v352 = vld [vmem:[%s7 + $0x4] sm:$0xf]
    %v353 = vld [vmem:[%s7 + $0x8] sm:$0xf]
    %v354 = vld [vmem:[%s7 + $0xc] sm:$0xf]
    %v355 = vld [vmem:[%s7 + $0x10] sm:$0xf]
    %v356 = vld [vmem:[%s7 + $0x14] sm:$0xf]
    %v357 = vld [vmem:[%s7 + $0x18] sm:$0xf]
    %v358 = vld [vmem:[%s7 + $0x1c] sm:$0xf]
    %v359 = vld [vmem:[%s7 + $0x20] sm:$0xf]
    %v360 = vld [vmem:[%s7 + $0x24] sm:$0xf]
    %v361 = vld [vmem:[%s7 + $0x28] sm:$0xf]
    %v362 = vld [vmem:[%s7 + $0x2c] sm:$0xf]
    %v363 = vld [vmem:[%s7 + $0x30] sm:$0xf]
    %v364 = vld [vmem:[%s7 + $0x34] sm:$0xf]
    %v365 = vld [vmem:[%s7 + $0x38] sm:$0xf]
    %v366 = vld [vmem:[%s7 + $0x3c] sm:$0xf]
    %v367 = vld [vmem:[%s8] sm:$0x1]
    %v369 = vlaneseq
    %v370 = vshrl.u32 %v369, 7
    %v371 = vsub.s32 0, %v370
    %v372 = vrot.slane %v367, %v371
    %v390 = vunpack.c.l.b16 %v351
    %v391 = vunpack.c.l.b16 %v352
    %v392 = vunpack.c.l.b16 %v353
    %v393 = vunpack.c.l.b16 %v354
    %v394 = vunpack.c.l.b16 %v355
    %v395 = vunpack.c.l.b16 %v356
    %v396 = vunpack.c.l.b16 %v357
    %v397 = vunpack.c.l.b16 %v358
    %v398 = vunpack.c.l.b16 %v359
    %v399 = vunpack.c.l.b16 %v360
    %v400 = vunpack.c.l.b16 %v361
    %v401 = vunpack.c.l.b16 %v362
    %v402 = vunpack.c.l.b16 %v363
    %v403 = vunpack.c.l.b16 %v364
    %v404 = vunpack.c.l.b16 %v365
    %v405 = vunpack.c.l.b16 %v366
    %v406 = vpack.c.b16 %v391, %v390
    %v407 = vpack.c.b16 %v393, %v392
    %v408 = vpack.c.b16 %v395, %v394
    %v409 = vpack.c.b16 %v397, %v396
    %v410 = vpack.c.b16 %v399, %v398
    %v411 = vpack.c.b16 %v401, %v400
    %v412 = vpack.c.b16 %v403, %v402
    %v413 = vpack.c.b16 %v405, %v404
    %422 = vmatprep.subr.bf16.mxu0 0
    %423 = vmatpush1.bf16.msra.mxu0 %v406
    %424 = vmatprep.subr.bf16.mxu0 0
    %425 = vmatpush1.bf16.msra.mxu0 %v407
    %426 = vmatprep.subr.bf16.mxu0 0
    %427 = vmatpush1.bf16.msra.mxu0 %v408
    %428 = vmatprep.subr.bf16.mxu0 0
    %429 = vmatpush1.bf16.msra.mxu0 %v409
    %430 = vmatprep.subr.bf16.mxu0 0
    %431 = vmatpush1.bf16.msra.mxu0 %v410
    %432 = vmatprep.subr.bf16.mxu0 0
    %433 = vmatpush1.bf16.msra.mxu0 %v411
    %434 = vmatprep.subr.bf16.mxu0 0
    %435 = vmatpush1.bf16.msra.mxu0 %v412
    %436 = vmatprep.subr.bf16.mxu0 0
    %437 = vmatpush1.bf16.msra.mxu0 %v413
    %438 = vmatprep.subr.bf16.mxu0 0
    %439 = vmatpush1.bf16.msra.mxu0 0
    %440 = vmatprep.subr.bf16.mxu0 0
    %441 = vmatpush1.bf16.msra.mxu0 0
    %442 = vmatprep.subr.bf16.mxu0 0
    %443 = vmatpush1.bf16.msra.mxu0 0
    %444 = vmatprep.subr.bf16.mxu0 0
    %445 = vmatpush1.bf16.msra.mxu0 0
    %446 = vmatprep.subr.bf16.mxu0 0
    %447 = vmatpush1.bf16.msra.mxu0 0
    %448 = vmatprep.subr.bf16.mxu0 0
    %449 = vmatpush1.bf16.msra.mxu0 0
    %450 = vmatprep.subr.bf16.mxu0 0
    %451 = vmatpush1.bf16.msra.mxu0 0
    %452 = vmatprep.subr.bf16.mxu0 0
    %453 = vmatpush1.bf16.msra.mxu0 0
    %454 = vmatprep.mubr.bf16.mxu0 0
    %455 = vmatmul.mubr.bf16.gmra.mrb[0].mxu0 %v350
    %v456 = vpop.f32.mrb[0].mxu0
    %v457 = vadd.f32 %v372, %v456
    %v458 = vpop.f32.mrb[0].mxu0
    %v459 = vpop.f32.mrb[0].mxu0
    %v460 = vpop.f32.mrb[0].mxu0
    %461 = vdwg.mxu0
    %v462 = vtanh.pop %v457
    %v463 = vsub.f32 %v457, %v462
    %v464 = vpack.c.bf16 %v463, %v463
    %v465 = vld [vmem:[%s9] sm:$0xf]
    %v466 = vld [vmem:[%s9 + $0x4] sm:$0xf]
    %v467 = vld [vmem:[%s9 + $0x8] sm:$0xf]
    %v468 = vld [vmem:[%s9 + $0xc] sm:$0xf]
    %v469 = vld [vmem:[%s10] sm:$0x1]
    %v471 = vlaneseq
    %v472 = vshrl.u32 %v471, 7
    %v473 = vsub.s32 0, %v472
    %v474 = vrot.slane %v469, %v473
    %v480 = vunpack.c.l.b16 %v465
    %v481 = vunpack.c.l.b16 %v466
    %v482 = vunpack.c.l.b16 %v467
    %v483 = vunpack.c.l.b16 %v468
    %v484 = vpack.c.b16 %v481, %v480
    %v485 = vpack.c.b16 %v483, %v482
    %v489 = vsel %vm122, %v464, 0
    %491 = vmatprep.subr.bf16.mxu0 0
    %492 = vmatpush1.bf16.msra.mxu0 %v484
    %493 = vmatprep.subr.bf16.mxu0 0
    %494 = vmatpush1.bf16.msra.mxu0 %v485
    %495 = vmatprep.subr.bf16.mxu0 0
    %496 = vmatpush1.bf16.msra.mxu0 0
    %497 = vmatprep.subr.bf16.mxu0 0
    %498 = vmatpush1.bf16.msra.mxu0 0
    %499 = vmatprep.subr.bf16.mxu0 0
    %500 = vmatpush1.bf16.msra.mxu0 0
    %501 = vmatprep.subr.bf16.mxu0 0
    %502 = vmatpush1.bf16.msra.mxu0 0
    %503 = vmatprep.subr.bf16.mxu0 0
    %504 = vmatpush1.bf16.msra.mxu0 0
    %505 = vmatprep.subr.bf16.mxu0 0
    %506 = vmatpush1.bf16.msra.mxu0 0
    %507 = vmatprep.subr.bf16.mxu0 0
    %508 = vmatpush1.bf16.msra.mxu0 0
    %509 = vmatprep.subr.bf16.mxu0 0
    %510 = vmatpush1.bf16.msra.mxu0 0
    %511 = vmatprep.subr.bf16.mxu0 0
    %512 = vmatpush1.bf16.msra.mxu0 0
    %513 = vmatprep.subr.bf16.mxu0 0
    %514 = vmatpush1.bf16.msra.mxu0 0
    %515 = vmatprep.subr.bf16.mxu0 0
    %516 = vmatpush1.bf16.msra.mxu0 0
    %517 = vmatprep.subr.bf16.mxu0 0
    %518 = vmatpush1.bf16.msra.mxu0 0
    %519 = vmatprep.subr.bf16.mxu0 0
    %520 = vmatpush1.bf16.msra.mxu0 0
    %521 = vmatprep.subr.bf16.mxu0 0
    %522 = vmatpush1.bf16.msra.mxu0 0
    %523 = vmatprep.mubr.bf16.mxu0 0
    %524 = vmatmul.mubr.bf16.gmra.mrb[0].mxu0 %v489
    %v525 = vpop.f32.mrb[0].mxu0
    %v526 = vadd.f32 %v474, %v525
    %v527 = vpop.f32.mrb[0].mxu0
    %v528 = vpop.f32.mrb[0].mxu0
    %v529 = vpop.f32.mrb[0].mxu0
    %530 = vdwg.mxu0
    %v531 = vtanh.pop %v526
    %v532 = vsub.f32 %v526, %v531
    %vm533 = vcmask 31744
    %534 = vst.msk [vmem:[%s11] sm:$0xff] %vm533, %v532
    // Predicated region
    $region50: #{tpu_custom_call.1} parent=1 // pred_check
      _
    $region51: #{tpu_custom_call.1} parent=1 // pred_check_branch
      %536 = sbr.rel (0) target = $region53
    $region52: #{tpu_custom_call.1} parent=1 // pred_region
      _
    $region53: #{tpu_custom_call.1} parent=1 // pred_fallthru
      _
    // Predicated region
    $region54: #{tpu_custom_call.1} parent=1 // pred_check
      _
    $region55: #{tpu_custom_call.1} parent=1 // pred_check_branch
      %538 = sbr.rel (0) target = $region57
    $region56: #{tpu_custom_call.1} parent=1 // pred_region
      _
    $region57: #{tpu_custom_call.1} parent=1 // pred_fallthru
      _
    %539 = vsyncpa [#allocation3], 1

</llo_original>
